<compile_context>
chip_gen: v5e
topology: v5e:2x2
jax: 0.10.0
libtpu: 0.0.40
codegen_flags: <defaults>
</compile_context>

<pallas_src>
import functools

import jax
import jax.numpy as jnp
from jax.experimental import pallas as pl
from jax.experimental.pallas import tpu as pltpu


_SQRT2_INV = 0.7071067811865476


def _exact_gelu(x):
    # Matches torch.nn.functional.gelu default (erf-based, not tanh approx).
    return 0.5 * x * (1.0 + jax.lax.erf(x * _SQRT2_INV))


def _round_up(x, m):
    return (x + m - 1) // m * m


def _vmem_limit_bytes():
    try:
        cap = pltpu.get_tpu_info().vmem_capacity_bytes
    except Exception:
        cap = 64 * 1024 * 1024  # conservative (v7x per-TC VMEM)
    return int(cap * 7 // 8)    # leave headroom for compiler-internal scratch


def _projector_kernel(x_ref, w1_ref, b1_ref, w2_ref, b2_ref, o_ref, h_ref):
    # x_ref : (tm, Dv)  bf16     w1_ref: (Dv, Dt) bf16    b1_ref: (1, Dt) f32
    # w2_ref: (Dt, tn)  bf16     b2_ref: (1, tn)  f32
    # o_ref : (tm, tn)  out dt   h_ref : (tm, Dt) bf16 VMEM scratch
    j = pl.program_id(1)

    # linear_1 + bias + exact GELU, computed once per row tile and cached.
    @pl.when(j == 0)
    def _():
        h = jnp.dot(x_ref[...], w1_ref[...],
                    preferred_element_type=jnp.float32)
        h = h + b1_ref[...]
        h_ref[...] = _exact_gelu(h).astype(h_ref.dtype)

    # linear_2 + bias for this (row tile, output-column tile).
    acc = jnp.dot(h_ref[...], w2_ref[...],
                  preferred_element_type=jnp.float32)
    acc = acc + b2_ref[...]
    o_ref[...] = acc.astype(o_ref.dtype)


@functools.partial(jax.jit, static_argnames=("tm", "tn"))
def vision_projector(modality_features, w1, b1, w2, b2, *, tm=256, tn=512):
    """modality_features: (B, S, Dv); w1: (Dv, Dt); b1: (Dt,); w2: (Dt, Dt);
    b2: (Dt,).  Weights are pre-transposed vs. nn.Linear's (out, in) layout.
    Returns (B, S, Dt) in the input dtype."""
    assert tm % 8 == 0 and tn % 128 == 0
    B, S, Dv = modality_features.shape
    assert w1.shape[0] == Dv
    Dt = w1.shape[1]
    assert w2.shape == (Dt, Dt) and b1.shape == (Dt,) and b2.shape == (Dt,)
    out_dtype = modality_features.dtype

    M = B * S
    # Padded, hardware-friendly sizes.  Zero padding keeps the valid region
    # exact; it is sliced back out at the end.
    tm_eff = min(tm, _round_up(M, 8))
    m_pad = _round_up(M, tm_eff)
    dv_pad = _round_up(Dv, 128)
    dt_pad = _round_up(Dt, 128)
    tn_eff = min(tn, dt_pad)
    dt_pad = _round_up(dt_pad, tn_eff)

    # bf16 MXU operands with f32 accumulation; biases stay f32.
    x2d = modality_features.reshape(M, Dv).astype(jnp.bfloat16)
    x2d = jnp.pad(x2d, ((0, m_pad - M), (0, dv_pad - Dv)))
    w1_p = jnp.pad(w1.astype(jnp.bfloat16),
                   ((0, dv_pad - Dv), (0, dt_pad - Dt)))
    w2_p = jnp.pad(w2.astype(jnp.bfloat16),
                   ((0, dt_pad - Dt), (0, dt_pad - Dt)))
    b1_p = jnp.pad(b1.astype(jnp.float32), (0, dt_pad - Dt)).reshape(1, dt_pad)
    b2_p = jnp.pad(b2.astype(jnp.float32), (0, dt_pad - Dt)).reshape(1, dt_pad)

    grid = (m_pad // tm_eff, dt_pad // tn_eff)

    out_bytes = m_pad * dt_pad * jnp.dtype(out_dtype).itemsize
    cost = pl.CostEstimate(
        flops=2 * m_pad * dv_pad * dt_pad + 2 * m_pad * dt_pad * dt_pad,
        transcendentals=m_pad * dt_pad,  # erf in GELU
        bytes_accessed=(x2d.size * 2 + w1_p.size * 2 + w2_p.size * 2
                        + b1_p.size * 4 + b2_p.size * 4 + out_bytes),
    )

    out2d = pl.pallas_call(
        _projector_kernel,
        out_shape=jax.ShapeDtypeStruct((m_pad, dt_pad), out_dtype),
        grid_spec=pltpu.PrefetchScalarGridSpec(
            num_scalar_prefetch=0,
            grid=grid,
            in_specs=[
                # x rows: depend only on i (revisited across j, no re-DMA).
                pl.BlockSpec((tm_eff, dv_pad), lambda i, j: (i, 0)),
                # W1 / b1: resident (constant block index).
                pl.BlockSpec((dv_pad, dt_pad), lambda i, j: (0, 0)),
                pl.BlockSpec((1, dt_pad), lambda i, j: (0, 0)),
                # W2 / b2: streamed over output-column tiles.
                pl.BlockSpec((dt_pad, tn_eff), lambda i, j: (0, j)),
                pl.BlockSpec((1, tn_eff), lambda i, j: (0, j)),
            ],
            out_specs=pl.BlockSpec((tm_eff, tn_eff), lambda i, j: (i, j)),
            scratch_shapes=[pltpu.VMEM((tm_eff, dt_pad), jnp.bfloat16)],
        ),
        compiler_params=pltpu.CompilerParams(
            # Row tiles are independent -> megacore-parallel (v7x).  The
            # column axis must stay "arbitrary": the h scratch is filled at
            # j == 0 and reused for j > 0 on the same core.
            dimension_semantics=("parallel", "arbitrary"),
            vmem_limit_bytes=_vmem_limit_bytes(),
        ),
        cost_estimate=cost,
    )(x2d, w1_p, b1_p, w2_p, b2_p)

    return out2d[:M, :Dt].reshape(B, S, Dt)


def _reference(modality_features, w1, b1, w2, b2):
    h = jnp.einsum("bsd,dt->bst", modality_features, w1) + b1
    h = _exact_gelu(h)
    return jnp.einsum("bst,tu->bsu", h, w2) + b2


if __name__ == "__main__":
    # Small shapes consistent with the module (vision hidden -> text hidden).
    B, S, Dv, Dt = 2, 40, 32, 160

    key = jax.random.PRNGKey(0)
    k_x, k_w1, k_b1, k_w2, k_b2 = jax.random.split(key, 5)

    x = jax.random.normal(k_x, (B, S, Dv), dtype=jnp.float32)
    # nn.Linear weights, pre-transposed to (in_features, out_features).
    w1 = jax.random.normal(k_w1, (Dv, Dt), dtype=jnp.float32) * 0.05
    b1 = jax.random.normal(k_b1, (Dt,), dtype=jnp.float32) * 0.01
    w2 = jax.random.normal(k_w2, (Dt, Dt), dtype=jnp.float32) * 0.05
    b2 = jax.random.normal(k_b2, (Dt,), dtype=jnp.float32) * 0.01

    ref = _reference(x, w1, b1, w2, b2)

    # 1) production-default tiles (single grid step at these toy shapes).
    out = jax.block_until_ready(vision_projector(x, w1, b1, w2, b2))
    # 2) small tiles to exercise a multi-tile grid, row/column padding and the
    #    h-scratch reuse across output-column tiles.
    out_tiled = jax.block_until_ready(
        vision_projector(x, w1, b1, w2, b2, tm=32, tn=128))

    assert out.shape == (B, S, Dt), out.shape
    assert out_tiled.shape == (B, S, Dt), out_tiled.shape
    # bf16 MXU operands + f32 accumulation vs. the pure-f32 reference.
    for o in (out, out_tiled):
        err = float(jnp.max(jnp.abs(o - ref)))
        assert jnp.allclose(o, ref, atol=3e-2, rtol=3e-2), err

    print("KERNEL_OK")
</pallas_src>

<mosaic_0001>
module attributes {stable_mosaic.version = 11 : i64} {
  func.func @_projector_kernel(%arg0: i32, %arg1: i32, %arg2: memref<80x128xbf16, #tpu.memory_space<vmem>>, %arg3: memref<128x256xbf16, #tpu.memory_space<vmem>>, %arg4: memref<1x256xf32, #tpu.memory_space<vmem>>, %arg5: memref<256x256xbf16, #tpu.memory_space<vmem>>, %arg6: memref<1x256xf32, #tpu.memory_space<vmem>>, %arg7: memref<80x256xf32, #tpu.memory_space<vmem>>, %arg8: memref<80x256xbf16, #tpu.memory_space<vmem>>) attributes {dimension_semantics = [#tpu.dimension_semantics<parallel>, #tpu.dimension_semantics<arbitrary>], iteration_bounds = array<i64: 1, 1>, scalar_prefetch = 0 : i64, scratch_operands = 1 : i64, tpu.core_type = #tpu.core_type<tc>, window_params = [{transform_indices = @transform_0, window_bounds = array<i64: 80, 128>}, {pipeline_mode = #tpu.pipeline_mode<synchronous>, transform_indices = @transform_1, window_bounds = array<i64: 128, 256>}, {pipeline_mode = #tpu.pipeline_mode<synchronous>, transform_indices = @transform_2, window_bounds = array<i64: 1, 256>}, {transform_indices = @transform_3, window_bounds = array<i64: 256, 256>}, {transform_indices = @transform_4, window_bounds = array<i64: 1, 256>}, {transform_indices = @transform_5, window_bounds = array<i64: 80, 256>}]} {
    %c0_i32 = arith.constant 0 : i32
    %0 = arith.cmpi eq, %arg1, %c0_i32 : i32
    %1 = arith.extui %0 : i1 to i32
    %c0_i32_0 = arith.constant 0 : i32
    %2 = arith.cmpi ne, %1, %c0_i32_0 : i32
    scf.if %2 {
      %c0_8 = arith.constant 0 : index
      %c0_9 = arith.constant 0 : index
      %10 = vector.load %arg2[%c0_8, %c0_9] : memref<80x128xbf16, #tpu.memory_space<vmem>>, vector<80x128xbf16>
      %c0_10 = arith.constant 0 : index
      %c0_11 = arith.constant 0 : index
      %11 = vector.load %arg3[%c0_10, %c0_11] : memref<128x256xbf16, #tpu.memory_space<vmem>>, vector<128x256xbf16>
      %cst_12 = arith.constant dense<0.000000e+00> : vector<80x256xf32>
      %12 = tpu.matmul %10, %11, %cst_12 {dimension_numbers = #tpu.dot_dimension_numbers<[1], [0], [0], [1], [0, 0, 1, 1], [], []>} : vector<80x128xbf16>, vector<128x256xbf16>, vector<80x256xf32> -> vector<80x256xf32>
      %c0_13 = arith.constant 0 : index
      %c0_14 = arith.constant 0 : index
      %13 = vector.load %arg4[%c0_13, %c0_14] : memref<1x256xf32, #tpu.memory_space<vmem>>, vector<1x256xf32>
      %14 = vector.broadcast %13 : vector<1x256xf32> to vector<80x256xf32>
      %15 = arith.addf %12, %14 : vector<80x256xf32>
      %cst_15 = arith.constant 5.000000e-01 : f32
      %16 = vector.broadcast %cst_15 : f32 to vector<80x256xf32>
      %17 = arith.mulf %16, %15 : vector<80x256xf32>
      %cst_16 = arith.constant 0.707106769 : f32
      %18 = vector.broadcast %cst_16 : f32 to vector<80x256xf32>
      %19 = arith.mulf %15, %18 : vector<80x256xf32>
      %20 = math.erf %19 : vector<80x256xf32>
      %cst_17 = arith.constant 1.000000e+00 : f32
      %21 = vector.broadcast %cst_17 : f32 to vector<80x256xf32>
      %22 = arith.addf %21, %20 : vector<80x256xf32>
      %23 = arith.mulf %17, %22 : vector<80x256xf32>
      %24 = arith.truncf %23 : vector<80x256xf32> to vector<80x256xbf16>
      %c0_18 = arith.constant 0 : index
      %c0_19 = arith.constant 0 : index
      %25 = vector.load %arg8[%c0_18, %c0_19] : memref<80x256xbf16, #tpu.memory_space<vmem>>, vector<80x256xbf16>
      tpu.vector_store %arg8[%c0_18, %c0_19], %24 {strides = array<i32>} : memref<80x256xbf16, #tpu.memory_space<vmem>>, vector<80x256xbf16>,
    } else {
    }
    %c0 = arith.constant 0 : index
    %c0_1 = arith.constant 0 : index
    %3 = vector.load %arg8[%c0, %c0_1] : memref<80x256xbf16, #tpu.memory_space<vmem>>, vector<80x256xbf16>
    %c0_2 = arith.constant 0 : index
    %c0_3 = arith.constant 0 : index
    %4 = vector.load %arg5[%c0_2, %c0_3] : memref<256x256xbf16, #tpu.memory_space<vmem>>, vector<256x256xbf16>
    %cst = arith.constant dense<0.000000e+00> : vector<80x256xf32>
    %5 = tpu.matmul %3, %4, %cst {dimension_numbers = #tpu.dot_dimension_numbers<[1], [0], [0], [1], [0, 0, 1, 1], [], []>} : vector<80x256xbf16>, vector<256x256xbf16>, vector<80x256xf32> -> vector<80x256xf32>
    %c0_4 = arith.constant 0 : index
    %c0_5 = arith.constant 0 : index
    %6 = vector.load %arg6[%c0_4, %c0_5] : memref<1x256xf32, #tpu.memory_space<vmem>>, vector<1x256xf32>
    %7 = vector.broadcast %6 : vector<1x256xf32> to vector<80x256xf32>
    %8 = arith.addf %5, %7 : vector<80x256xf32>
    %c0_6 = arith.constant 0 : index
    %c0_7 = arith.constant 0 : index
    %9 = vector.load %arg7[%c0_6, %c0_7] : memref<80x256xf32, #tpu.memory_space<vmem>>, vector<80x256xf32>
    tpu.vector_store %arg7[%c0_6, %c0_7], %8 {strides = array<i32>} : memref<80x256xf32, #tpu.memory_space<vmem>>, vector<80x256xf32>,
    return
  }
  func.func @transform_0(%arg0: i32, %arg1: i32) -> (i32, i32) {
    %c0_i32 = arith.constant 0 : i32
    %c0_i32_0 = arith.constant 0 : i32
    return %arg0, %c0_i32 : i32, i32
  }
  func.func @transform_1(%arg0: i32, %arg1: i32) -> (i32, i32) {
    %c0_i32 = arith.constant 0 : i32
    %c0_i32_0 = arith.constant 0 : i32
    %c0_i32_1 = arith.constant 0 : i32
    return %c0_i32, %c0_i32_0 : i32, i32
  }
  func.func @transform_2(%arg0: i32, %arg1: i32) -> (i32, i32) {
    %c0_i32 = arith.constant 0 : i32
    %c0_i32_0 = arith.constant 0 : i32
    %c0_i32_1 = arith.constant 0 : i32
    return %c0_i32, %c0_i32_0 : i32, i32
  }
  func.func @transform_3(%arg0: i32, %arg1: i32) -> (i32, i32) {
    %c0_i32 = arith.constant 0 : i32
    %c0_i32_0 = arith.constant 0 : i32
    return %c0_i32, %arg1 : i32, i32
  }
  func.func @transform_4(%arg0: i32, %arg1: i32) -> (i32, i32) {
    %c0_i32 = arith.constant 0 : i32
    %c0_i32_0 = arith.constant 0 : i32
    return %c0_i32, %arg1 : i32, i32
  }
  func.func @transform_5(%arg0: i32, %arg1: i32) -> (i32, i32) {
    %c0_i32 = arith.constant 0 : i32
    return %arg0, %arg1 : i32, i32
  }
}

</mosaic_0001>

<llo_original>
// kernel: vision_projector.1
$region0: #{vision_projector.1}
  #allocation0 [shape = 'u32[]', space=smem, size = 0x4, offset = 0x4, fixed_abs, tag = 'smem constant byte address 0x4 - core index']
  #allocation1 [shape = 'u32[72,128]{1,0:T(1,128)}', space=vmem, size = 0x9000, scoped, tag = 'internal scratch']
  #allocation2 [shape = 'bf16[80,256]{1,0:T(8,128)(2,1)}', space=vmem, size = 0xa000, scoped, tag = 'scratch operand']
  %s0 = inlined_call_operand.vmem [shape: bf16[80,128], index: 0, kind: input, shape index: {}]
  %s1 = inlined_call_operand.vmem [shape: bf16[128,256], index: 1, kind: input, shape index: {}]
  %s2 = inlined_call_operand.vmem [shape: f32[1,256], index: 2, kind: input, shape index: {}]
  %s3 = inlined_call_operand.vmem [shape: bf16[256,256], index: 3, kind: input, shape index: {}]
  %s4 = inlined_call_operand.vmem [shape: f32[1,256], index: 4, kind: input, shape index: {}]
  %s5 = inlined_call_operand.hbm [shape: f32[80,256], index: 5, kind: output, shape index: {}]
  %s6 = sld [smem:[#allocation0]]
  $region34: #{vision_projector.1} parent=0
    _
  %s8 = ssub.s32 1, %s6
  %s9 = scalar_select 0, %s8, %s6
  $region1: #{vision_projector.1} parent=0
    #allocation3 [shape = 'u8[81920]{0}', space=vmem, size = 0x14000, scoped, tag = 'output window, operand 0, single buffered']
    #allocation4 [shape = 's32[1]{0}', space=sflag, size = 0x4, scoped, tag = 'scoped memory for vision_projector.1']
    %10 = vsyncpa [#allocation4], 0
    // Predicated region
    $region2: #{vision_projector.1} parent=1 // pred_check
      _
    $region3: #{vision_projector.1} parent=1 // pred_check_branch
      %12 = sbr.rel (0) target = $region5
    $region4: #{vision_projector.1} parent=1 // pred_region
      _
    $region5: #{vision_projector.1} parent=1 // pred_fallthru
      _
    // Predicated region
    $region6: #{vision_projector.1} parent=1 // pred_check
      _
    $region7: #{vision_projector.1} parent=1 // pred_check_branch
      %14 = sbr.rel (0) target = $region9
    $region8: #{vision_projector.1} parent=1 // pred_region
      _
    $region9: #{vision_projector.1} parent=1 // pred_fallthru
      _
    // Predicated region
    $region10: #{vision_projector.1} parent=1 // pred_check
      _
    $region11: #{vision_projector.1} parent=1 // pred_check_branch
      %16 = sbr.rel (0) target = $region13
    $region12: #{vision_projector.1} parent=1 // pred_region
      _
    $region13: #{vision_projector.1} parent=1 // pred_fallthru
      _
    // Predicated region
    $region14: #{vision_projector.1} parent=1 // pred_check
      _
    $region15: #{vision_projector.1} parent=1 // pred_check_branch
      %18 = sbr.rel (0) target = $region17
    $region16: #{vision_projector.1} parent=1 // pred_region
      _
    $region17: #{vision_projector.1} parent=1 // pred_fallthru
      _
    // Predicated region
    $region18: #{vision_projector.1} parent=1 // pred_check
      _
    $region19: #{vision_projector.1} parent=1 // pred_check_branch
      %20 = sbr.rel (0) target = $region21
    $region20: #{vision_projector.1} parent=1 // pred_region
      _
    $region21: #{vision_projector.1} parent=1 // pred_fallthru
      _
    %p21 = scmp.eq.s32.totalorder 0, 0
    // Predicated region
    $region22: #{vision_projector.1} parent=1 // pred_check
      %p22 = pneg %p21
    $region23: #{vision_projector.1} parent=1 // pred_check_branch
      %24 = sbr.rel (%p22) target = $region25
    $region24: #{vision_projector.1} parent=1 // pred_region
      %v25 = vld [vmem:[%s0] sm:$0xf]
      %v26 = vld [vmem:[%s0 + $0x4] sm:$0xf]
      %v27 = vld [vmem:[%s0 + $0x8] sm:$0xf]
      %v28 = vld [vmem:[%s0 + $0xc] sm:$0xf]
      %v29 = vld [vmem:[%s0 + $0x10] sm:$0xf]
      %v30 = vld [vmem:[%s0 + $0x14] sm:$0xf]
      %v31 = vld [vmem:[%s0 + $0x18] sm:$0xf]
      %v32 = vld [vmem:[%s0 + $0x1c] sm:$0xf]
      %v33 = vld [vmem:[%s0 + $0x20] sm:$0xf]
      %v34 = vld [vmem:[%s0 + $0x24] sm:$0xf]
      %v35 = vld [vmem:[%s1] sm:$0xff]
      %v36 = vld [vmem:[%s1 + $0x8] sm:$0xff]
      %v37 = vld [vmem:[%s1 + $0x10] sm:$0xff]
      %v38 = vld [vmem:[%s1 + $0x18] sm:$0xff]
      %v39 = vld [vmem:[%s1 + $0x20] sm:$0xff]
      %v40 = vld [vmem:[%s1 + $0x28] sm:$0xff]
      %v41 = vld [vmem:[%s1 + $0x30] sm:$0xff]
      %v42 = vld [vmem:[%s1 + $0x38] sm:$0xff]
      %v43 = vld [vmem:[%s1 + $0x40] sm:$0xff]
      %v44 = vld [vmem:[%s1 + $0x48] sm:$0xff]
      %v45 = vld [vmem:[%s1 + $0x50] sm:$0xff]
      %v46 = vld [vmem:[%s1 + $0x58] sm:$0xff]
      %v47 = vld [vmem:[%s1 + $0x60] sm:$0xff]
      %v48 = vld [vmem:[%s1 + $0x68] sm:$0xff]
      %v49 = vld [vmem:[%s1 + $0x70] sm:$0xff]
      %v50 = vld [vmem:[%s1 + $0x78] sm:$0xff]
      %v51 = vld [vmem:[%s2] sm:$0x3]
      %v53 = vperm.slane %v51, 0
      %v54 = vperm.slane %v51, 1
      %v67 = vunpack.c.l.b16 %v25
      %v68 = vunpack.c.l.b16 %v26
      %v69 = vunpack.c.l.b16 %v27
      %v70 = vunpack.c.l.b16 %v28
      %v71 = vunpack.c.l.b16 %v29
      %v72 = vunpack.c.l.b16 %v30
      %v73 = vunpack.c.l.b16 %v31
      %v74 = vunpack.c.l.b16 %v32
      %v75 = vunpack.c.l.b16 %v33
      %v76 = vunpack.c.l.b16 %v34
      %v77 = vpack.c.b16 %v68, %v67
      %v78 = vpack.c.b16 %v70, %v69
      %v79 = vpack.c.b16 %v72, %v71
      %v80 = vpack.c.b16 %v74, %v73
      %v81 = vpack.c.b16 %v76, %v75
      %v103 = vunpack.c.l.b16 %v35
      %v104 = vunpack.c.h.b16 %v35
      %v105 = vunpack.c.l.b16 %v36
      %v106 = vunpack.c.h.b16 %v36
      %v107 = vunpack.c.l.b16 %v37
      %v108 = vunpack.c.h.b16 %v37
      %v109 = vunpack.c.l.b16 %v38
      %v110 = vunpack.c.h.b16 %v38
      %v111 = vunpack.c.l.b16 %v39
      %v112 = vunpack.c.h.b16 %v39
      %v113 = vunpack.c.l.b16 %v40
      %v114 = vunpack.c.h.b16 %v40
      %v115 = vunpack.c.l.b16 %v41
      %v116 = vunpack.c.h.b16 %v41
      %v117 = vunpack.c.l.b16 %v42
      %v118 = vunpack.c.h.b16 %v42
      %v119 = vunpack.c.l.b16 %v43
      %v120 = vunpack.c.h.b16 %v43
      %v121 = vunpack.c.l.b16 %v44
      %v122 = vunpack.c.h.b16 %v44
      %v123 = vunpack.c.l.b16 %v45
      %v124 = vunpack.c.h.b16 %v45
      %v125 = vunpack.c.l.b16 %v46
      %v126 = vunpack.c.h.b16 %v46
      %v127 = vunpack.c.l.b16 %v47
      %v128 = vunpack.c.h.b16 %v47
      %v129 = vunpack.c.l.b16 %v48
      %v130 = vunpack.c.h.b16 %v48
      %v131 = vunpack.c.l.b16 %v49
      %v132 = vunpack.c.h.b16 %v49
      %v133 = vunpack.c.l.b16 %v50
      %v134 = vunpack.c.h.b16 %v50
      %v135 = vpack.c.b16 %v105, %v103
      %v136 = vpack.c.b16 %v106, %v104
      %v137 = vpack.c.b16 %v109, %v107
      %v138 = vpack.c.b16 %v110, %v108
      %v139 = vpack.c.b16 %v113, %v111
      %v140 = vpack.c.b16 %v114, %v112
      %v141 = vpack.c.b16 %v117, %v115
      %v142 = vpack.c.b16 %v118, %v116
      %v143 = vpack.c.b16 %v121, %v119
      %v144 = vpack.c.b16 %v122, %v120
      %v145 = vpack.c.b16 %v125, %v123
      %v146 = vpack.c.b16 %v126, %v124
      %v147 = vpack.c.b16 %v129, %v127
      %v148 = vpack.c.b16 %v130, %v128
      %v149 = vpack.c.b16 %v133, %v131
      %v150 = vpack.c.b16 %v134, %v132
      %167 = vmatpush.bf16.msra.mxu0 %v149
      %168 = vmatpush.bf16.msra.mxu0 %v147
      %169 = vmatpush.bf16.msra.mxu0 %v145
      %170 = vmatpush.bf16.msra.mxu0 %v143
      %171 = vmatpush.bf16.msra.mxu0 %v141
      %172 = vmatpush.bf16.msra.mxu0 %v139
      %173 = vmatpush.bf16.msra.mxu0 %v137
      %174 = vmatpush.bf16.msra.mxu0 %v135
      %175 = vmatmul.bf16.gmra.mxu0 %v77
      %v176 = vpop.f32.mrf.mxu0
      %v177 = vadd.f32 %v53, %v176
      %v178 = vpop.f32.mrf.mxu0
      %v179 = vadd.f32 %v53, %v178
      %180 = vmatmul.bf16.gmra.mxu0 %v78
      %v181 = vpop.f32.mrf.mxu0
      %v182 = vadd.f32 %v53, %v181
      %v183 = vpop.f32.mrf.mxu0
      %v184 = vadd.f32 %v53, %v183
      %185 = vmatmul.bf16.gmra.mxu0 %v79
      %v186 = vpop.f32.mrf.mxu0
      %v187 = vadd.f32 %v53, %v186
      %v188 = vpop.f32.mrf.mxu0
      %v189 = vadd.f32 %v53, %v188
      %190 = vmatmul.bf16.gmra.mxu0 %v80
      %v191 = vpop.f32.mrf.mxu0
      %v192 = vadd.f32 %v53, %v191
      %v193 = vpop.f32.mrf.mxu0
      %v194 = vadd.f32 %v53, %v193
      %195 = vmatmul.bf16.gmra.mxu0 %v81
      %v196 = vpop.f32.mrf.mxu0
      %v197 = vadd.f32 %v53, %v196
      %v198 = vpop.f32.mrf.mxu0
      %v199 = vadd.f32 %v53, %v198
      %200 = vdwg.mxu0
      %201 = vmatpush.bf16.msra.mxu0 %v150
      %202 = vmatpush.bf16.msra.mxu0 %v148
      %203 = vmatpush.bf16.msra.mxu0 %v146
      %204 = vmatpush.bf16.msra.mxu0 %v144
      %205 = vmatpush.bf16.msra.mxu0 %v142
      %206 = vmatpush.bf16.msra.mxu0 %v140
      %207 = vmatpush.bf16.msra.mxu0 %v138
      %208 = vmatpush.bf16.msra.mxu0 %v136
      %209 = vmatmul.bf16.gmra.mxu0 %v77
      %v210 = vpop.f32.mrf.mxu0
      %v211 = vadd.f32 %v54, %v210
      %v212 = vpop.f32.mrf.mxu0
      %v213 = vadd.f32 %v54, %v212
      %214 = vmatmul.bf16.gmra.mxu0 %v78
      %v215 = vpop.f32.mrf.mxu0
      %v216 = vadd.f32 %v54, %v215
      %v217 = vpop.f32.mrf.mxu0
      %v218 = vadd.f32 %v54, %v217
      %219 = vmatmul.bf16.gmra.mxu0 %v79
      %v220 = vpop.f32.mrf.mxu0
      %v221 = vadd.f32 %v54, %v220
      %v222 = vpop.f32.mrf.mxu0
      %v223 = vadd.f32 %v54, %v222
      %224 = vmatmul.bf16.gmra.mxu0 %v80
      %v225 = vpop.f32.mrf.mxu0
      %v226 = vadd.f32 %v54, %v225
      %v227 = vpop.f32.mrf.mxu0
      %v228 = vadd.f32 %v54, %v227
      %229 = vmatmul.bf16.gmra.mxu0 %v81
      %v230 = vpop.f32.mrf.mxu0
      %v231 = vadd.f32 %v54, %v230
      %v232 = vpop.f32.mrf.mxu0
      %v233 = vadd.f32 %v54, %v232
      %234 = vdwg.mxu0
      %v235 = vmul.f32 %v177, 0.5
      %v236 = vmul.f32 %v211, 0.5
      %v237 = vmul.f32 %v179, 0.5
      %v238 = vmul.f32 %v213, 0.5
      %v239 = vmul.f32 %v182, 0.5
      %v240 = vmul.f32 %v216, 0.5
      %v241 = vmul.f32 %v184, 0.5
      %v242 = vmul.f32 %v218, 0.5
      %v243 = vmul.f32 %v187, 0.5
      %v244 = vmul.f32 %v221, 0.5
      %v245 = vmul.f32 %v189, 0.5
      %v246 = vmul.f32 %v223, 0.5
      %v247 = vmul.f32 %v192, 0.5
      %v248 = vmul.f32 %v226, 0.5
      %v249 = vmul.f32 %v194, 0.5
      %v250 = vmul.f32 %v228, 0.5
      %v251 = vmul.f32 %v197, 0.5
      %v252 = vmul.f32 %v231, 0.5
      %v253 = vmul.f32 %v199, 0.5
      %v254 = vmul.f32 %v233, 0.5
      %v255 = vmul.f32 %v177, 0.70710677
      %v256 = vmul.f32 %v211, 0.70710677
      %v257 = vmul.f32 %v179, 0.70710677
      %v258 = vmul.f32 %v213, 0.70710677
      %v259 = vmul.f32 %v182, 0.70710677
      %v260 = vmul.f32 %v216, 0.70710677
      %v261 = vmul.f32 %v184, 0.70710677
      %v262 = vmul.f32 %v218, 0.70710677
      %v263 = vmul.f32 %v187, 0.70710677
      %v264 = vmul.f32 %v221, 0.70710677
      %v265 = vmul.f32 %v189, 0.70710677
      %v266 = vmul.f32 %v223, 0.70710677
      %v267 = vmul.f32 %v192, 0.70710677
      %v268 = vmul.f32 %v226, 0.70710677
      %v269 = vmul.f32 %v194, 0.70710677
      %v270 = vmul.f32 %v228, 0.70710677
      %v271 = vmul.f32 %v197, 0.70710677
      %v272 = vmul.f32 %v231, 0.70710677
      %v273 = vmul.f32 %v199, 0.70710677
      %v274 = vmul.f32 %v233, 0.70710677
      %v275 = vmul.f32 %v255, %v255
      %v276 = vmin.f32 16.0, %v275
      %v277 = vmul.f32 %v276, 2.1237322e-06
      %v278 = vadd.f32 %v277, 0.00028619796
      %v279 = vmul.f32 %v276, %v278
      %v280 = vadd.f32 %v279, 0.0036580483
      %v281 = vmul.f32 %v276, %v280
      %v282 = vadd.f32 %v281, 0.05243302
      %v283 = vmul.f32 %v276, %v282
      %v284 = vadd.f32 %v283, 0.18741608
      %v285 = vmul.f32 %v276, %v284
      %v286 = vadd.f32 %v285, 1.1283791
      %v287 = vmul.f32 %v255, %v286
      %v288 = vmul.f32 %v276, 3.8918573e-05
      %v289 = vadd.f32 %v288, 0.001143296
      %v290 = vmul.f32 %v276, %v289
      %v291 = vadd.f32 %v290, 0.014752088
      %v292 = vmul.f32 %v276, %v291
      %v293 = vadd.f32 %v292, 0.112945676
      %v294 = vmul.f32 %v276, %v293
      %v295 = vadd.f32 %v294, 0.4994258
      %v296 = vmul.f32 %v276, %v295
      %v297 = vadd.f32 %v296, 1.0
      %v298 = vrcp.pop %v297
      %v299 = vmul.f32 %v297, %v298
      %v300 = vsub.f32 1.0, %v299
      %v301 = vmul.f32 %v298, %v300
      %v302 = vadd.f32 %v298, %v301
      %vm303 = vweird.f32 %v297
      %vm304 = vweird.f32 %v298
      %vm305 = vmor %vm303, %vm304
      %v306 = vsel %vm305, %v298, %v302
      %v307 = vand.u32 2147483647, %v297
      %vm308 = vcmp.eq.f32.partialorder %v307, 8.507059e+37
      %v309 = vand.u32 %v297, 2147483648
      %v310 = vor.u32 1.1754944e-38, %v309
      %v311 = vsel %vm308, %v310, %v306
      %v312 = vmul.f32 %v287, %v311
      %v313 = vmin.f32 %v312, 1.0
      %v314 = vmax.f32 %v313, -1.0
      %v315 = vmul.f32 %v256, %v256
      %v316 = vmin.f32 16.0, %v315
      %v317 = vmul.f32 %v316, 2.1237322e-06
      %v318 = vadd.f32 %v317, 0.00028619796
      %v319 = vmul.f32 %v316, %v318
      %v320 = vadd.f32 %v319, 0.0036580483
      %v321 = vmul.f32 %v316, %v320
      %v322 = vadd.f32 %v321, 0.05243302
      %v323 = vmul.f32 %v316, %v322
      %v324 = vadd.f32 %v323, 0.18741608
      %v325 = vmul.f32 %v316, %v324
      %v326 = vadd.f32 %v325, 1.1283791
      %v327 = vmul.f32 %v256, %v326
      %v328 = vmul.f32 %v316, 3.8918573e-05
      %v329 = vadd.f32 %v328, 0.001143296
      %v330 = vmul.f32 %v316, %v329
      %v331 = vadd.f32 %v330, 0.014752088
      %v332 = vmul.f32 %v316, %v331
      %v333 = vadd.f32 %v332, 0.112945676
      %v334 = vmul.f32 %v316, %v333
      %v335 = vadd.f32 %v334, 0.4994258
      %v336 = vmul.f32 %v316, %v335
      %v337 = vadd.f32 %v336, 1.0
      %v338 = vrcp.pop %v337
      %v339 = vmul.f32 %v337, %v338
      %v340 = vsub.f32 1.0, %v339
      %v341 = vmul.f32 %v338, %v340
      %v342 = vadd.f32 %v338, %v341
      %vm343 = vweird.f32 %v337
      %vm344 = vweird.f32 %v338
      %vm345 = vmor %vm343, %vm344
      %v346 = vsel %vm345, %v338, %v342
      %v347 = vand.u32 2147483647, %v337
      %vm348 = vcmp.eq.f32.partialorder %v347, 8.507059e+37
      %v349 = vand.u32 %v337, 2147483648
      %v350 = vor.u32 1.1754944e-38, %v349
      %v351 = vsel %vm348, %v350, %v346
      %v352 = vmul.f32 %v327, %v351
      %v353 = vmin.f32 %v352, 1.0
      %v354 = vmax.f32 %v353, -1.0
      %v355 = vmul.f32 %v257, %v257
      %v356 = vmin.f32 16.0, %v355
      %v357 = vmul.f32 %v356, 2.1237322e-06
      %v358 = vadd.f32 %v357, 0.00028619796
      %v359 = vmul.f32 %v356, %v358
      %v360 = vadd.f32 %v359, 0.0036580483
      %v361 = vmul.f32 %v356, %v360
      %v362 = vadd.f32 %v361, 0.05243302
      %v363 = vmul.f32 %v356, %v362
      %v364 = vadd.f32 %v363, 0.18741608
      %v365 = vmul.f32 %v356, %v364
      %v366 = vadd.f32 %v365, 1.1283791
      %v367 = vmul.f32 %v257, %v366
      %v368 = vmul.f32 %v356, 3.8918573e-05
      %v369 = vadd.f32 %v368, 0.001143296
      %v370 = vmul.f32 %v356, %v369
      %v371 = vadd.f32 %v370, 0.014752088
      %v372 = vmul.f32 %v356, %v371
      %v373 = vadd.f32 %v372, 0.112945676
      %v374 = vmul.f32 %v356, %v373
      %v375 = vadd.f32 %v374, 0.4994258
      %v376 = vmul.f32 %v356, %v375
      %v377 = vadd.f32 %v376, 1.0
      %v378 = vrcp.pop %v377
      %v379 = vmul.f32 %v377, %v378
      %v380 = vsub.f32 1.0, %v379
      %v381 = vmul.f32 %v378, %v380
      %v382 = vadd.f32 %v378, %v381
      %vm383 = vweird.f32 %v377
      %vm384 = vweird.f32 %v378
      %vm385 = vmor %vm383, %vm384
      %v386 = vsel %vm385, %v378, %v382
      %v387 = vand.u32 2147483647, %v377
      %vm388 = vcmp.eq.f32.partialorder %v387, 8.507059e+37
      %v389 = vand.u32 %v377, 2147483648
      %v390 = vor.u32 1.1754944e-38, %v389
      %v391 = vsel %vm388, %v390, %v386
      %v392 = vmul.f32 %v367, %v391
      %v393 = vmin.f32 %v392, 1.0
      %v394 = vmax.f32 %v393, -1.0
      %v395 = vmul.f32 %v258, %v258
      %v396 = vmin.f32 16.0, %v395
      %v397 = vmul.f32 %v396, 2.1237322e-06
      %v398 = vadd.f32 %v397, 0.00028619796
      %v399 = vmul.f32 %v396, %v398
      %v400 = vadd.f32 %v399, 0.0036580483
      %v401 = vmul.f32 %v396, %v400
      %v402 = vadd.f32 %v401, 0.05243302
      %v403 = vmul.f32 %v396, %v402
      %v404 = vadd.f32 %v403, 0.18741608
      %v405 = vmul.f32 %v396, %v404
      %v406 = vadd.f32 %v405, 1.1283791
      %v407 = vmul.f32 %v258, %v406
      %v408 = vmul.f32 %v396, 3.8918573e-05
      %v409 = vadd.f32 %v408, 0.001143296
      %v410 = vmul.f32 %v396, %v409
      %v411 = vadd.f32 %v410, 0.014752088
      %v412 = vmul.f32 %v396, %v411
      %v413 = vadd.f32 %v412, 0.112945676
      %v414 = vmul.f32 %v396, %v413
      %v415 = vadd.f32 %v414, 0.4994258
      %v416 = vmul.f32 %v396, %v415
      %v417 = vadd.f32 %v416, 1.0
      %v418 = vrcp.pop %v417
      %v419 = vmul.f32 %v417, %v418
      %v420 = vsub.f32 1.0, %v419
      %v421 = vmul.f32 %v418, %v420
      %v422 = vadd.f32 %v418, %v421
      %vm423 = vweird.f32 %v417
      %vm424 = vweird.f32 %v418
      %vm425 = vmor %vm423, %vm424
      %v426 = vsel %vm425, %v418, %v422
      %v427 = vand.u32 2147483647, %v417
      %vm428 = vcmp.eq.f32.partialorder %v427, 8.507059e+37
      %v429 = vand.u32 %v417, 2147483648
      %v430 = vor.u32 1.1754944e-38, %v429
      %v431 = vsel %vm428, %v430, %v426
      %v432 = vmul.f32 %v407, %v431
      %v433 = vmin.f32 %v432, 1.0
      %v434 = vmax.f32 %v433, -1.0
      %v435 = vmul.f32 %v259, %v259
      %v436 = vmin.f32 16.0, %v435
      %v437 = vmul.f32 %v436, 2.1237322e-06
      %v438 = vadd.f32 %v437, 0.00028619796
      %v439 = vmul.f32 %v436, %v438
      %v440 = vadd.f32 %v439, 0.0036580483
      %v441 = vmul.f32 %v436, %v440
      %v442 = vadd.f32 %v441, 0.05243302
      %v443 = vmul.f32 %v436, %v442
      %v444 = vadd.f32 %v443, 0.18741608
      %v445 = vmul.f32 %v436, %v444
      %v446 = vadd.f32 %v445, 1.1283791
      %v447 = vmul.f32 %v259, %v446
      %v448 = vmul.f32 %v436, 3.8918573e-05
      %v449 = vadd.f32 %v448, 0.001143296
      %v450 = vmul.f32 %v436, %v449
      %v451 = vadd.f32 %v450, 0.014752088
      %v452 = vmul.f32 %v436, %v451
      %v453 = vadd.f32 %v452, 0.112945676
      %v454 = vmul.f32 %v436, %v453
      %v455 = vadd.f32 %v454, 0.4994258
      %v456 = vmul.f32 %v436, %v455
      %v457 = vadd.f32 %v456, 1.0
      %v458 = vrcp.pop %v457
      %v459 = vmul.f32 %v457, %v458
      %v460 = vsub.f32 1.0, %v459
      %v461 = vmul.f32 %v458, %v460
      %v462 = vadd.f32 %v458, %v461
      %vm463 = vweird.f32 %v457
      %vm464 = vweird.f32 %v458
      %vm465 = vmor %vm463, %vm464
      %v466 = vsel %vm465, %v458, %v462
      %v467 = vand.u32 2147483647, %v457
      %vm468 = vcmp.eq.f32.partialorder %v467, 8.507059e+37
      %v469 = vand.u32 %v457, 2147483648
      %v470 = vor.u32 1.1754944e-38, %v469
      %v471 = vsel %vm468, %v470, %v466
      %v472 = vmul.f32 %v447, %v471
      %v473 = vmin.f32 %v472, 1.0
      %v474 = vmax.f32 %v473, -1.0
      %v475 = vmul.f32 %v260, %v260
      %v476 = vmin.f32 16.0, %v475
      %v477 = vmul.f32 %v476, 2.1237322e-06
      %v478 = vadd.f32 %v477, 0.00028619796
      %v479 = vmul.f32 %v476, %v478
      %v480 = vadd.f32 %v479, 0.0036580483
      %v481 = vmul.f32 %v476, %v480
      %v482 = vadd.f32 %v481, 0.05243302
      %v483 = vmul.f32 %v476, %v482
      %v484 = vadd.f32 %v483, 0.18741608
      %v485 = vmul.f32 %v476, %v484
      %v486 = vadd.f32 %v485, 1.1283791
      %v487 = vmul.f32 %v260, %v486
      %v488 = vmul.f32 %v476, 3.8918573e-05
      %v489 = vadd.f32 %v488, 0.001143296
      %v490 = vmul.f32 %v476, %v489
      %v491 = vadd.f32 %v490, 0.014752088
      %v492 = vmul.f32 %v476, %v491
      %v493 = vadd.f32 %v492, 0.112945676
      %v494 = vmul.f32 %v476, %v493
      %v495 = vadd.f32 %v494, 0.4994258
      %v496 = vmul.f32 %v476, %v495
      %v497 = vadd.f32 %v496, 1.0
      %v498 = vrcp.pop %v497
      %v499 = vmul.f32 %v497, %v498
      %v500 = vsub.f32 1.0, %v499
      %v501 = vmul.f32 %v498, %v500
      %v502 = vadd.f32 %v498, %v501
      %vm503 = vweird.f32 %v497
      %vm504 = vweird.f32 %v498
      %vm505 = vmor %vm503, %vm504
      %v506 = vsel %vm505, %v498, %v502
      %v507 = vand.u32 2147483647, %v497
      %vm508 = vcmp.eq.f32.partialorder %v507, 8.507059e+37
      %v509 = vand.u32 %v497, 2147483648
      %v510 = vor.u32 1.1754944e-38, %v509
      %v511 = vsel %vm508, %v510, %v506
      %v512 = vmul.f32 %v487, %v511
      %v513 = vmin.f32 %v512, 1.0
      %v514 = vmax.f32 %v513, -1.0
      %v515 = vmul.f32 %v261, %v261
      %v516 = vmin.f32 16.0, %v515
      %v517 = vmul.f32 %v516, 2.1237322e-06
      %v518 = vadd.f32 %v517, 0.00028619796
      %v519 = vmul.f32 %v516, %v518
      %v520 = vadd.f32 %v519, 0.0036580483
      %v521 = vmul.f32 %v516, %v520
      %v522 = vadd.f32 %v521, 0.05243302
      %v523 = vmul.f32 %v516, %v522
      %v524 = vadd.f32 %v523, 0.18741608
      %v525 = vmul.f32 %v516, %v524
      %v526 = vadd.f32 %v525, 1.1283791
      %v527 = vmul.f32 %v261, %v526
      %v528 = vmul.f32 %v516, 3.8918573e-05
      %v529 = vadd.f32 %v528, 0.001143296
      %v530 = vmul.f32 %v516, %v529
      %v531 = vadd.f32 %v530, 0.014752088
      %v532 = vmul.f32 %v516, %v531
      %v533 = vadd.f32 %v532, 0.112945676
      %v534 = vmul.f32 %v516, %v533
      %v535 = vadd.f32 %v534, 0.4994258
      %v536 = vmul.f32 %v516, %v535
      %v537 = vadd.f32 %v536, 1.0
      %v538 = vrcp.pop %v537
      %v539 = vmul.f32 %v537, %v538
      %v540 = vsub.f32 1.0, %v539
      %v541 = vmul.f32 %v538, %v540
      %v542 = vadd.f32 %v538, %v541
      %vm543 = vweird.f32 %v537
      %vm544 = vweird.f32 %v538
      %vm545 = vmor %vm543, %vm544
      %v546 = vsel %vm545, %v538, %v542
      %v547 = vand.u32 2147483647, %v537
      %vm548 = vcmp.eq.f32.partialorder %v547, 8.507059e+37
      %v549 = vand.u32 %v537, 2147483648
      %v550 = vor.u32 1.1754944e-38, %v549
      %v551 = vsel %vm548, %v550, %v546
      %v552 = vmul.f32 %v527, %v551
      %v553 = vmin.f32 %v552, 1.0
      %v554 = vmax.f32 %v553, -1.0
      %v555 = vmul.f32 %v262, %v262
      %v556 = vmin.f32 16.0, %v555
      %v557 = vmul.f32 %v556, 2.1237322e-06
      %v558 = vadd.f32 %v557, 0.00028619796
      %v559 = vmul.f32 %v556, %v558
      %v560 = vadd.f32 %v559, 0.0036580483
      %v561 = vmul.f32 %v556, %v560
      %v562 = vadd.f32 %v561, 0.05243302
      %v563 = vmul.f32 %v556, %v562
      %v564 = vadd.f32 %v563, 0.18741608
      %v565 = vmul.f32 %v556, %v564
      %v566 = vadd.f32 %v565, 1.1283791
      %v567 = vmul.f32 %v262, %v566
      %v568 = vmul.f32 %v556, 3.8918573e-05
      %v569 = vadd.f32 %v568, 0.001143296
      %v570 = vmul.f32 %v556, %v569
      %v571 = vadd.f32 %v570, 0.014752088
      %v572 = vmul.f32 %v556, %v571
      %v573 = vadd.f32 %v572, 0.112945676
      %v574 = vmul.f32 %v556, %v573
      %v575 = vadd.f32 %v574, 0.4994258
      %v576 = vmul.f32 %v556, %v575
      %v577 = vadd.f32 %v576, 1.0
      %v578 = vrcp.pop %v577
      %v579 = vmul.f32 %v577, %v578
      %v580 = vsub.f32 1.0, %v579
      %v581 = vmul.f32 %v578, %v580
      %v582 = vadd.f32 %v578, %v581
      %vm583 = vweird.f32 %v577
      %vm584 = vweird.f32 %v578
      %vm585 = vmor %vm583, %vm584
      %v586 = vsel %vm585, %v578, %v582
      %v587 = vand.u32 2147483647, %v577
      %vm588 = vcmp.eq.f32.partialorder %v587, 8.507059e+37
      %v589 = vand.u32 %v577, 2147483648
      %v590 = vor.u32 1.1754944e-38, %v589
      %v591 = vsel %vm588, %v590, %v586
      %v592 = vmul.f32 %v567, %v591
      %v593 = vmin.f32 %v592, 1.0
      %v594 = vmax.f32 %v593, -1.0
      %v595 = vmul.f32 %v263, %v263
      %v596 = vmin.f32 16.0, %v595
      %v597 = vmul.f32 %v596, 2.1237322e-06
      %v598 = vadd.f32 %v597, 0.00028619796
      %v599 = vmul.f32 %v596, %v598
      %v600 = vadd.f32 %v599, 0.0036580483
      %v601 = vmul.f32 %v596, %v600
      %v602 = vadd.f32 %v601, 0.05243302
      %v603 = vmul.f32 %v596, %v602
      %v604 = vadd.f32 %v603, 0.18741608
      %v605 = vmul.f32 %v596, %v604
      %v606 = vadd.f32 %v605, 1.1283791
      %v607 = vmul.f32 %v263, %v606
      %v608 = vmul.f32 %v596, 3.8918573e-05
      %v609 = vadd.f32 %v608, 0.001143296
      %v610 = vmul.f32 %v596, %v609
      %v611 = vadd.f32 %v610, 0.014752088
      %v612 = vmul.f32 %v596, %v611
      %v613 = vadd.f32 %v612, 0.112945676
      %v614 = vmul.f32 %v596, %v613
      %v615 = vadd.f32 %v614, 0.4994258
      %v616 = vmul.f32 %v596, %v615
      %v617 = vadd.f32 %v616, 1.0
      %v618 = vrcp.pop %v617
      %v619 = vmul.f32 %v617, %v618
      %v620 = vsub.f32 1.0, %v619
      %v621 = vmul.f32 %v618, %v620
      %v622 = vadd.f32 %v618, %v621
      %vm623 = vweird.f32 %v617
      %vm624 = vweird.f32 %v618
      %vm625 = vmor %vm623, %vm624
      %v626 = vsel %vm625, %v618, %v622
      %v627 = vand.u32 2147483647, %v617
      %vm628 = vcmp.eq.f32.partialorder %v627, 8.507059e+37
      %v629 = vand.u32 %v617, 2147483648
      %v630 = vor.u32 1.1754944e-38, %v629
      %v631 = vsel %vm628, %v630, %v626
      %v632 = vmul.f32 %v607, %v631
      %v633 = vmin.f32 %v632, 1.0
      %v634 = vmax.f32 %v633, -1.0
      %v635 = vmul.f32 %v264, %v264
      %v636 = vmin.f32 16.0, %v635
      %v637 = vmul.f32 %v636, 2.1237322e-06
      %v638 = vadd.f32 %v637, 0.00028619796
      %v639 = vmul.f32 %v636, %v638
      %v640 = vadd.f32 %v639, 0.0036580483
      %v641 = vmul.f32 %v636, %v640
      %v642 = vadd.f32 %v641, 0.05243302
      %v643 = vmul.f32 %v636, %v642
      %v644 = vadd.f32 %v643, 0.18741608
      %v645 = vmul.f32 %v636, %v644
      %v646 = vadd.f32 %v645, 1.1283791
      %v647 = vmul.f32 %v264, %v646
      %v648 = vmul.f32 %v636, 3.8918573e-05
      %v649 = vadd.f32 %v648, 0.001143296
      %v650 = vmul.f32 %v636, %v649
      %v651 = vadd.f32 %v650, 0.014752088
      %v652 = vmul.f32 %v636, %v651
      %v653 = vadd.f32 %v652, 0.112945676
      %v654 = vmul.f32 %v636, %v653
      %v655 = vadd.f32 %v654, 0.4994258
      %v656 = vmul.f32 %v636, %v655
      %v657 = vadd.f32 %v656, 1.0
      %v658 = vrcp.pop %v657
      %v659 = vmul.f32 %v657, %v658
      %v660 = vsub.f32 1.0, %v659
      %v661 = vmul.f32 %v658, %v660
      %v662 = vadd.f32 %v658, %v661
      %vm663 = vweird.f32 %v657
      %vm664 = vweird.f32 %v658
      %vm665 = vmor %vm663, %vm664
      %v666 = vsel %vm665, %v658, %v662
      %v667 = vand.u32 2147483647, %v657
      %vm668 = vcmp.eq.f32.partialorder %v667, 8.507059e+37
      %v669 = vand.u32 %v657, 2147483648
      %v670 = vor.u32 1.1754944e-38, %v669
      %v671 = vsel %vm668, %v670, %v666
      %v672 = vmul.f32 %v647, %v671
      %v673 = vmin.f32 %v672, 1.0
      %v674 = vmax.f32 %v673, -1.0
      %v675 = vmul.f32 %v265, %v265
      %v676 = vmin.f32 16.0, %v675
      %v677 = vmul.f32 %v676, 2.1237322e-06
      %v678 = vadd.f32 %v677, 0.00028619796
      %v679 = vmul.f32 %v676, %v678
      %v680 = vadd.f32 %v679, 0.0036580483
      %v681 = vmul.f32 %v676, %v680
      %v682 = vadd.f32 %v681, 0.05243302
      %v683 = vmul.f32 %v676, %v682
      %v684 = vadd.f32 %v683, 0.18741608
      %v685 = vmul.f32 %v676, %v684
      %v686 = vadd.f32 %v685, 1.1283791
      %v687 = vmul.f32 %v265, %v686
      %v688 = vmul.f32 %v676, 3.8918573e-05
      %v689 = vadd.f32 %v688, 0.001143296
      %v690 = vmul.f32 %v676, %v689
      %v691 = vadd.f32 %v690, 0.014752088
      %v692 = vmul.f32 %v676, %v691
      %v693 = vadd.f32 %v692, 0.112945676
      %v694 = vmul.f32 %v676, %v693
      %v695 = vadd.f32 %v694, 0.4994258
      %v696 = vmul.f32 %v676, %v695
      %v697 = vadd.f32 %v696, 1.0
      %v698 = vrcp.pop %v697
      %v699 = vmul.f32 %v697, %v698
      %v700 = vsub.f32 1.0, %v699
      %v701 = vmul.f32 %v698, %v700
      %v702 = vadd.f32 %v698, %v701
      %vm703 = vweird.f32 %v697
      %vm704 = vweird.f32 %v698
      %vm705 = vmor %vm703, %vm704
      %v706 = vsel %vm705, %v698, %v702
      %v707 = vand.u32 2147483647, %v697
      %vm708 = vcmp.eq.f32.partialorder %v707, 8.507059e+37
      %v709 = vand.u32 %v697, 2147483648
      %v710 = vor.u32 1.1754944e-38, %v709
      %v711 = vsel %vm708, %v710, %v706
      %v712 = vmul.f32 %v687, %v711
      %v713 = vmin.f32 %v712, 1.0
      %v714 = vmax.f32 %v713, -1.0
      %v715 = vmul.f32 %v266, %v266
      %v716 = vmin.f32 16.0, %v715
      %v717 = vmul.f32 %v716, 2.1237322e-06
      %v718 = vadd.f32 %v717, 0.00028619796
      %v719 = vmul.f32 %v716, %v718
      %v720 = vadd.f32 %v719, 0.0036580483
      %v721 = vmul.f32 %v716, %v720
      %v722 = vadd.f32 %v721, 0.05243302
      %v723 = vmul.f32 %v716, %v722
      %v724 = vadd.f32 %v723, 0.18741608
      %v725 = vmul.f32 %v716, %v724
      %v726 = vadd.f32 %v725, 1.1283791
      %v727 = vmul.f32 %v266, %v726
      %v728 = vmul.f32 %v716, 3.8918573e-05
      %v729 = vadd.f32 %v728, 0.001143296
      %v730 = vmul.f32 %v716, %v729
      %v731 = vadd.f32 %v730, 0.014752088
      %v732 = vmul.f32 %v716, %v731
      %v733 = vadd.f32 %v732, 0.112945676
      %v734 = vmul.f32 %v716, %v733
      %v735 = vadd.f32 %v734, 0.4994258
      %v736 = vmul.f32 %v716, %v735
      %v737 = vadd.f32 %v736, 1.0
      %v738 = vrcp.pop %v737
      %v739 = vmul.f32 %v737, %v738
      %v740 = vsub.f32 1.0, %v739
      %v741 = vmul.f32 %v738, %v740
      %v742 = vadd.f32 %v738, %v741
      %vm743 = vweird.f32 %v737
      %vm744 = vweird.f32 %v738
      %vm745 = vmor %vm743, %vm744
      %v746 = vsel %vm745, %v738, %v742
      %v747 = vand.u32 2147483647, %v737
      %vm748 = vcmp.eq.f32.partialorder %v747, 8.507059e+37
      %v749 = vand.u32 %v737, 2147483648
      %v750 = vor.u32 1.1754944e-38, %v749
      %v751 = vsel %vm748, %v750, %v746
      %v752 = vmul.f32 %v727, %v751
      %v753 = vmin.f32 %v752, 1.0
      %v754 = vmax.f32 %v753, -1.0
      %v755 = vmul.f32 %v267, %v267
      %v756 = vmin.f32 16.0, %v755
      %v757 = vmul.f32 %v756, 2.1237322e-06
      %v758 = vadd.f32 %v757, 0.00028619796
      %v759 = vmul.f32 %v756, %v758
      %v760 = vadd.f32 %v759, 0.0036580483
      %v761 = vmul.f32 %v756, %v760
      %v762 = vadd.f32 %v761, 0.05243302
      %v763 = vmul.f32 %v756, %v762
      %v764 = vadd.f32 %v763, 0.18741608
      %v765 = vmul.f32 %v756, %v764
      %v766 = vadd.f32 %v765, 1.1283791
      %v767 = vmul.f32 %v267, %v766
      %v768 = vmul.f32 %v756, 3.8918573e-05
      %v769 = vadd.f32 %v768, 0.001143296
      %v770 = vmul.f32 %v756, %v769
      %v771 = vadd.f32 %v770, 0.014752088
      %v772 = vmul.f32 %v756, %v771
      %v773 = vadd.f32 %v772, 0.112945676
      %v774 = vmul.f32 %v756, %v773
      %v775 = vadd.f32 %v774, 0.4994258
      %v776 = vmul.f32 %v756, %v775
      %v777 = vadd.f32 %v776, 1.0
      %v778 = vrcp.pop %v777
      %v779 = vmul.f32 %v777, %v778
      %v780 = vsub.f32 1.0, %v779
      %v781 = vmul.f32 %v778, %v780
      %v782 = vadd.f32 %v778, %v781
      %vm783 = vweird.f32 %v777
      %vm784 = vweird.f32 %v778
      %vm785 = vmor %vm783, %vm784
      %v786 = vsel %vm785, %v778, %v782
      %v787 = vand.u32 2147483647, %v777
      %vm788 = vcmp.eq.f32.partialorder %v787, 8.507059e+37
      %v789 = vand.u32 %v777, 2147483648
      %v790 = vor.u32 1.1754944e-38, %v789
      %v791 = vsel %vm788, %v790, %v786
      %v792 = vmul.f32 %v767, %v791
      %v793 = vmin.f32 %v792, 1.0
      %v794 = vmax.f32 %v793, -1.0
      %v795 = vmul.f32 %v268, %v268
      %v796 = vmin.f32 16.0, %v795
      %v797 = vmul.f32 %v796, 2.1237322e-06
      %v798 = vadd.f32 %v797, 0.00028619796
      %v799 = vmul.f32 %v796, %v798
      %v800 = vadd.f32 %v799, 0.0036580483
      %v801 = vmul.f32 %v796, %v800
      %v802 = vadd.f32 %v801, 0.05243302
      %v803 = vmul.f32 %v796, %v802
      %v804 = vadd.f32 %v803, 0.18741608
      %v805 = vmul.f32 %v796, %v804
      %v806 = vadd.f32 %v805, 1.1283791
      %v807 = vmul.f32 %v268, %v806
      %v808 = vmul.f32 %v796, 3.8918573e-05
      %v809 = vadd.f32 %v808, 0.001143296
      %v810 = vmul.f32 %v796, %v809
      %v811 = vadd.f32 %v810, 0.014752088
      %v812 = vmul.f32 %v796, %v811
      %v813 = vadd.f32 %v812, 0.112945676
      %v814 = vmul.f32 %v796, %v813
      %v815 = vadd.f32 %v814, 0.4994258
      %v816 = vmul.f32 %v796, %v815
      %v817 = vadd.f32 %v816, 1.0
      %v818 = vrcp.pop %v817
      %v819 = vmul.f32 %v817, %v818
      %v820 = vsub.f32 1.0, %v819
      %v821 = vmul.f32 %v818, %v820
      %v822 = vadd.f32 %v818, %v821
      %vm823 = vweird.f32 %v817
      %vm824 = vweird.f32 %v818
      %vm825 = vmor %vm823, %vm824
      %v826 = vsel %vm825, %v818, %v822
      %v827 = vand.u32 2147483647, %v817
      %vm828 = vcmp.eq.f32.partialorder %v827, 8.507059e+37
      %v829 = vand.u32 %v817, 2147483648
      %v830 = vor.u32 1.1754944e-38, %v829
      %v831 = vsel %vm828, %v830, %v826
      %v832 = vmul.f32 %v807, %v831
      %v833 = vmin.f32 %v832, 1.0
      %v834 = vmax.f32 %v833, -1.0
      %v835 = vmul.f32 %v269, %v269
      %v836 = vmin.f32 16.0, %v835
      %v837 = vmul.f32 %v836, 2.1237322e-06
      %v838 = vadd.f32 %v837, 0.00028619796
      %v839 = vmul.f32 %v836, %v838
      %v840 = vadd.f32 %v839, 0.0036580483
      %v841 = vmul.f32 %v836, %v840
      %v842 = vadd.f32 %v841, 0.05243302
      %v843 = vmul.f32 %v836, %v842
      %v844 = vadd.f32 %v843, 0.18741608
      %v845 = vmul.f32 %v836, %v844
      %v846 = vadd.f32 %v845, 1.1283791
      %v847 = vmul.f32 %v269, %v846
      %v848 = vmul.f32 %v836, 3.8918573e-05
      %v849 = vadd.f32 %v848, 0.001143296
      %v850 = vmul.f32 %v836, %v849
      %v851 = vadd.f32 %v850, 0.014752088
      %v852 = vmul.f32 %v836, %v851
      %v853 = vadd.f32 %v852, 0.112945676
      %v854 = vmul.f32 %v836, %v853
      %v855 = vadd.f32 %v854, 0.4994258
      %v856 = vmul.f32 %v836, %v855
      %v857 = vadd.f32 %v856, 1.0
      %v858 = vrcp.pop %v857
      %v859 = vmul.f32 %v857, %v858
      %v860 = vsub.f32 1.0, %v859
      %v861 = vmul.f32 %v858, %v860
      %v862 = vadd.f32 %v858, %v861
      %vm863 = vweird.f32 %v857
      %vm864 = vweird.f32 %v858
      %vm865 = vmor %vm863, %vm864
      %v866 = vsel %vm865, %v858, %v862
      %v867 = vand.u32 2147483647, %v857
      %vm868 = vcmp.eq.f32.partialorder %v867, 8.507059e+37
      %v869 = vand.u32 %v857, 2147483648
      %v870 = vor.u32 1.1754944e-38, %v869
      %v871 = vsel %vm868, %v870, %v866
      %v872 = vmul.f32 %v847, %v871
      %v873 = vmin.f32 %v872, 1.0
      %v874 = vmax.f32 %v873, -1.0
      %v875 = vmul.f32 %v270, %v270
      %v876 = vmin.f32 16.0, %v875
      %v877 = vmul.f32 %v876, 2.1237322e-06
      %v878 = vadd.f32 %v877, 0.00028619796
      %v879 = vmul.f32 %v876, %v878
      %v880 = vadd.f32 %v879, 0.0036580483
      %v881 = vmul.f32 %v876, %v880
      %v882 = vadd.f32 %v881, 0.05243302
      %v883 = vmul.f32 %v876, %v882
      %v884 = vadd.f32 %v883, 0.18741608
      %v885 = vmul.f32 %v876, %v884
      %v886 = vadd.f32 %v885, 1.1283791
      %v887 = vmul.f32 %v270, %v886
      %v888 = vmul.f32 %v876, 3.8918573e-05
      %v889 = vadd.f32 %v888, 0.001143296
      %v890 = vmul.f32 %v876, %v889
      %v891 = vadd.f32 %v890, 0.014752088
      %v892 = vmul.f32 %v876, %v891
      %v893 = vadd.f32 %v892, 0.112945676
      %v894 = vmul.f32 %v876, %v893
      %v895 = vadd.f32 %v894, 0.4994258
      %v896 = vmul.f32 %v876, %v895
      %v897 = vadd.f32 %v896, 1.0
      %v898 = vrcp.pop %v897
      %v899 = vmul.f32 %v897, %v898
      %v900 = vsub.f32 1.0, %v899
      %v901 = vmul.f32 %v898, %v900
      %v902 = vadd.f32 %v898, %v901
      %vm903 = vweird.f32 %v897
      %vm904 = vweird.f32 %v898
      %vm905 = vmor %vm903, %vm904
      %v906 = vsel %vm905, %v898, %v902
      %v907 = vand.u32 2147483647, %v897
      %vm908 = vcmp.eq.f32.partialorder %v907, 8.507059e+37
      %v909 = vand.u32 %v897, 2147483648
      %v910 = vor.u32 1.1754944e-38, %v909
      %v911 = vsel %vm908, %v910, %v906
      %v912 = vmul.f32 %v887, %v911
      %v913 = vmin.f32 %v912, 1.0
      %v914 = vmax.f32 %v913, -1.0
      %v915 = vmul.f32 %v271, %v271
      %v916 = vmin.f32 16.0, %v915
      %v917 = vmul.f32 %v916, 2.1237322e-06
      %v918 = vadd.f32 %v917, 0.00028619796
      %v919 = vmul.f32 %v916, %v918
      %v920 = vadd.f32 %v919, 0.0036580483
      %v921 = vmul.f32 %v916, %v920
      %v922 = vadd.f32 %v921, 0.05243302
      %v923 = vmul.f32 %v916, %v922
      %v924 = vadd.f32 %v923, 0.18741608
      %v925 = vmul.f32 %v916, %v924
      %v926 = vadd.f32 %v925, 1.1283791
      %v927 = vmul.f32 %v271, %v926
      %v928 = vmul.f32 %v916, 3.8918573e-05
      %v929 = vadd.f32 %v928, 0.001143296
      %v930 = vmul.f32 %v916, %v929
      %v931 = vadd.f32 %v930, 0.014752088
      %v932 = vmul.f32 %v916, %v931
      %v933 = vadd.f32 %v932, 0.112945676
      %v934 = vmul.f32 %v916, %v933
      %v935 = vadd.f32 %v934, 0.4994258
      %v936 = vmul.f32 %v916, %v935
      %v937 = vadd.f32 %v936, 1.0
      %v938 = vrcp.pop %v937
      %v939 = vmul.f32 %v937, %v938
      %v940 = vsub.f32 1.0, %v939
      %v941 = vmul.f32 %v938, %v940
      %v942 = vadd.f32 %v938, %v941
      %vm943 = vweird.f32 %v937
      %vm944 = vweird.f32 %v938
      %vm945 = vmor %vm943, %vm944
      %v946 = vsel %vm945, %v938, %v942
      %v947 = vand.u32 2147483647, %v937
      %vm948 = vcmp.eq.f32.partialorder %v947, 8.507059e+37
      %v949 = vand.u32 %v937, 2147483648
      %v950 = vor.u32 1.1754944e-38, %v949
      %v951 = vsel %vm948, %v950, %v946
      %v952 = vmul.f32 %v927, %v951
      %v953 = vmin.f32 %v952, 1.0
      %v954 = vmax.f32 %v953, -1.0
      %v955 = vmul.f32 %v272, %v272
      %v956 = vmin.f32 16.0, %v955
      %v957 = vmul.f32 %v956, 2.1237322e-06
      %v958 = vadd.f32 %v957, 0.00028619796
      %v959 = vmul.f32 %v956, %v958
      %v960 = vadd.f32 %v959, 0.0036580483
      %v961 = vmul.f32 %v956, %v960
      %v962 = vadd.f32 %v961, 0.05243302
      %v963 = vmul.f32 %v956, %v962
      %v964 = vadd.f32 %v963, 0.18741608
      %v965 = vmul.f32 %v956, %v964
      %v966 = vadd.f32 %v965, 1.1283791
      %v967 = vmul.f32 %v272, %v966
      %v968 = vmul.f32 %v956, 3.8918573e-05
      %v969 = vadd.f32 %v968, 0.001143296
      %v970 = vmul.f32 %v956, %v969
      %v971 = vadd.f32 %v970, 0.014752088
      %v972 = vmul.f32 %v956, %v971
      %v973 = vadd.f32 %v972, 0.112945676
      %v974 = vmul.f32 %v956, %v973
      %v975 = vadd.f32 %v974, 0.4994258
      %v976 = vmul.f32 %v956, %v975
      %v977 = vadd.f32 %v976, 1.0
      %v978 = vrcp.pop %v977
      %v979 = vmul.f32 %v977, %v978
      %v980 = vsub.f32 1.0, %v979
      %v981 = vmul.f32 %v978, %v980
      %v982 = vadd.f32 %v978, %v981
      %vm983 = vweird.f32 %v977
      %vm984 = vweird.f32 %v978
      %vm985 = vmor %vm983, %vm984
      %v986 = vsel %vm985, %v978, %v982
      %v987 = vand.u32 2147483647, %v977
      %vm988 = vcmp.eq.f32.partialorder %v987, 8.507059e+37
      %v989 = vand.u32 %v977, 2147483648
      %v990 = vor.u32 1.1754944e-38, %v989
      %v991 = vsel %vm988, %v990, %v986
      %v992 = vmul.f32 %v967, %v991
      %v993 = vmin.f32 %v992, 1.0
      %v994 = vmax.f32 %v993, -1.0
      %v995 = vmul.f32 %v273, %v273
      %v996 = vmin.f32 16.0, %v995
      %v997 = vmul.f32 %v996, 2.1237322e-06
      %v998 = vadd.f32 %v997, 0.00028619796
      %v999 = vmul.f32 %v996, %v998
      %v1000 = vadd.f32 %v999, 0.0036580483
      %v1001 = vmul.f32 %v996, %v1000
      %v1002 = vadd.f32 %v1001, 0.05243302
      %v1003 = vmul.f32 %v996, %v1002
      %v1004 = vadd.f32 %v1003, 0.18741608
      %v1005 = vmul.f32 %v996, %v1004
      %v1006 = vadd.f32 %v1005, 1.1283791
      %v1007 = vmul.f32 %v273, %v1006
      %v1008 = vmul.f32 %v996, 3.8918573e-05
      %v1009 = vadd.f32 %v1008, 0.001143296
      %v1010 = vmul.f32 %v996, %v1009
      %v1011 = vadd.f32 %v1010, 0.014752088
      %v1012 = vmul.f32 %v996, %v1011
      %v1013 = vadd.f32 %v1012, 0.112945676
      %v1014 = vmul.f32 %v996, %v1013
      %v1015 = vadd.f32 %v1014, 0.4994258
      %v1016 = vmul.f32 %v996, %v1015
      %v1017 = vadd.f32 %v1016, 1.0
      %v1018 = vrcp.pop %v1017
      %v1019 = vmul.f32 %v1017, %v1018
      %v1020 = vsub.f32 1.0, %v1019
      %v1021 = vmul.f32 %v1018, %v1020
      %v1022 = vadd.f32 %v1018, %v1021
      %vm1023 = vweird.f32 %v1017
      %vm1024 = vweird.f32 %v1018
      %vm1025 = vmor %vm1023, %vm1024
      %v1026 = vsel %vm1025, %v1018, %v1022
      %v1027 = vand.u32 2147483647, %v1017
      %vm1028 = vcmp.eq.f32.partialorder %v1027, 8.507059e+37
      %v1029 = vand.u32 %v1017, 2147483648
      %v1030 = vor.u32 1.1754944e-38, %v1029
      %v1031 = vsel %vm1028, %v1030, %v1026
      %v1032 = vmul.f32 %v1007, %v1031
      %v1033 = vmin.f32 %v1032, 1.0
      %v1034 = vmax.f32 %v1033, -1.0
      %v1035 = vmul.f32 %v274, %v274
      %v1036 = vmin.f32 16.0, %v1035
      %v1037 = vmul.f32 %v1036, 2.1237322e-06
      %v1038 = vadd.f32 %v1037, 0.00028619796
      %v1039 = vmul.f32 %v1036, %v1038
      %v1040 = vadd.f32 %v1039, 0.0036580483
      %v1041 = vmul.f32 %v1036, %v1040
      %v1042 = vadd.f32 %v1041, 0.05243302
      %v1043 = vmul.f32 %v1036, %v1042
      %v1044 = vadd.f32 %v1043, 0.18741608
      %v1045 = vmul.f32 %v1036, %v1044
      %v1046 = vadd.f32 %v1045, 1.1283791
      %v1047 = vmul.f32 %v274, %v1046
      %v1048 = vmul.f32 %v1036, 3.8918573e-05
      %v1049 = vadd.f32 %v1048, 0.001143296
      %v1050 = vmul.f32 %v1036, %v1049
      %v1051 = vadd.f32 %v1050, 0.014752088
      %v1052 = vmul.f32 %v1036, %v1051
      %v1053 = vadd.f32 %v1052, 0.112945676
      %v1054 = vmul.f32 %v1036, %v1053
      %v1055 = vadd.f32 %v1054, 0.4994258
      %v1056 = vmul.f32 %v1036, %v1055
      %v1057 = vadd.f32 %v1056, 1.0
      %v1058 = vrcp.pop %v1057
      %v1059 = vmul.f32 %v1057, %v1058
      %v1060 = vsub.f32 1.0, %v1059
      %v1061 = vmul.f32 %v1058, %v1060
      %v1062 = vadd.f32 %v1058, %v1061
      %vm1063 = vweird.f32 %v1057
      %vm1064 = vweird.f32 %v1058
      %vm1065 = vmor %vm1063, %vm1064
      %v1066 = vsel %vm1065, %v1058, %v1062
      %v1067 = vand.u32 2147483647, %v1057
      %vm1068 = vcmp.eq.f32.partialorder %v1067, 8.507059e+37
      %v1069 = vand.u32 %v1057, 2147483648
      %v1070 = vor.u32 1.1754944e-38, %v1069
      %v1071 = vsel %vm1068, %v1070, %v1066
      %v1072 = vmul.f32 %v1047, %v1071
      %v1073 = vmin.f32 %v1072, 1.0
      %v1074 = vmax.f32 %v1073, -1.0
      %v1075 = vadd.f32 %v314, 1.0
      %v1076 = vadd.f32 %v354, 1.0
      %v1077 = vadd.f32 %v394, 1.0
      %v1078 = vadd.f32 %v434, 1.0
      %v1079 = vadd.f32 %v474, 1.0
      %v1080 = vadd.f32 %v514, 1.0
      %v1081 = vadd.f32 %v554, 1.0
      %v1082 = vadd.f32 %v594, 1.0
      %v1083 = vadd.f32 %v634, 1.0
      %v1084 = vadd.f32 %v674, 1.0
      %v1085 = vadd.f32 %v714, 1.0
      %v1086 = vadd.f32 %v754, 1.0
      %v1087 = vadd.f32 %v794, 1.0
      %v1088 = vadd.f32 %v834, 1.0
      %v1089 = vadd.f32 %v874, 1.0
      %v1090 = vadd.f32 %v914, 1.0
      %v1091 = vadd.f32 %v954, 1.0
      %v1092 = vadd.f32 %v994, 1.0
      %v1093 = vadd.f32 %v1034, 1.0
      %v1094 = vadd.f32 %v1074, 1.0
      %v1095 = vmul.f32 %v235, %v1075
      %v1096 = vmul.f32 %v236, %v1076
      %v1097 = vmul.f32 %v237, %v1077
      %v1098 = vmul.f32 %v238, %v1078
      %v1099 = vmul.f32 %v239, %v1079
      %v1100 = vmul.f32 %v240, %v1080
      %v1101 = vmul.f32 %v241, %v1081
      %v1102 = vmul.f32 %v242, %v1082
      %v1103 = vmul.f32 %v243, %v1083
      %v1104 = vmul.f32 %v244, %v1084
      %v1105 = vmul.f32 %v245, %v1085
      %v1106 = vmul.f32 %v246, %v1086
      %v1107 = vmul.f32 %v247, %v1087
      %v1108 = vmul.f32 %v248, %v1088
      %v1109 = vmul.f32 %v249, %v1089
      %v1110 = vmul.f32 %v250, %v1090
      %v1111 = vmul.f32 %v251, %v1091
      %v1112 = vmul.f32 %v252, %v1092
      %v1113 = vmul.f32 %v253, %v1093
      %v1114 = vmul.f32 %v254, %v1094
      %v1115 = vpack.c.bf16 %v1096, %v1095
      %v1116 = vpack.c.bf16 %v1098, %v1097
      %v1117 = vpack.c.bf16 %v1100, %v1099
      %v1118 = vpack.c.bf16 %v1102, %v1101
      %v1119 = vpack.c.bf16 %v1104, %v1103
      %v1120 = vpack.c.bf16 %v1106, %v1105
      %v1121 = vpack.c.bf16 %v1108, %v1107
      %v1122 = vpack.c.bf16 %v1110, %v1109
      %v1123 = vpack.c.bf16 %v1112, %v1111
      %v1124 = vpack.c.bf16 %v1114, %v1113
      %1125 = vst [vmem:[#allocation2] sm:$0xff] %v1115
      %1126 = vst [vmem:[#allocation2 + $0x8] sm:$0xff] %v1116
      %1127 = vst [vmem:[#allocation2 + $0x10] sm:$0xff] %v1117
      %1128 = vst [vmem:[#allocation2 + $0x18] sm:$0xff] %v1118
      %1129 = vst [vmem:[#allocation2 + $0x20] sm:$0xff] %v1119
      %1130 = vst [vmem:[#allocation2 + $0x28] sm:$0xff] %v1120
      %1131 = vst [vmem:[#allocation2 + $0x30] sm:$0xff] %v1121
      %1132 = vst [vmem:[#allocation2 + $0x38] sm:$0xff] %v1122
      %1133 = vst [vmem:[#allocation2 + $0x40] sm:$0xff] %v1123
      %1134 = vst [vmem:[#allocation2 + $0x48] sm:$0xff] %v1124
    $region25: #{vision_projector.1} parent=1 // pred_fallthru
      _
    %v1135 = vld [vmem:[#allocation2] sm:$0xff]
    %v1136 = vld [vmem:[#allocation2 + $0x8] sm:$0xff]
    %v1137 = vld [vmem:[#allocation2 + $0x10] sm:$0xff]
    %v1138 = vld [vmem:[#allocation2 + $0x18] sm:$0xff]
    %v1139 = vld [vmem:[#allocation2 + $0x20] sm:$0xff]
    %v1140 = vld [vmem:[#allocation2 + $0x28] sm:$0xff]
    %v1141 = vld [vmem:[#allocation2 + $0x30] sm:$0xff]
    %v1142 = vld [vmem:[#allocation2 + $0x38] sm:$0xff]
    %v1143 = vld [vmem:[#allocation2 + $0x40] sm:$0xff]
    %v1144 = vld [vmem:[#allocation2 + $0x48] sm:$0xff]
    %v1145 = vld [vmem:[%s3] sm:$0xff]
    %v1146 = vld [vmem:[%s3 + $0x8] sm:$0xff]
    %v1147 = vld [vmem:[%s3 + $0x10] sm:$0xff]
    %v1148 = vld [vmem:[%s3 + $0x18] sm:$0xff]
    %v1149 = vld [vmem:[%s3 + $0x20] sm:$0xff]
    %v1150 = vld [vmem:[%s3 + $0x28] sm:$0xff]
    %v1151 = vld [vmem:[%s3 + $0x30] sm:$0xff]
    %v1152 = vld [vmem:[%s3 + $0x38] sm:$0xff]
    %v1153 = vld [vmem:[%s3 + $0x40] sm:$0xff]
    %v1154 = vld [vmem:[%s3 + $0x48] sm:$0xff]
    %v1155 = vld [vmem:[%s3 + $0x50] sm:$0xff]
    %v1156 = vld [vmem:[%s3 + $0x58] sm:$0xff]
    %v1157 = vld [vmem:[%s3 + $0x60] sm:$0xff]
    %v1158 = vld [vmem:[%s3 + $0x68] sm:$0xff]
    %v1159 = vld [vmem:[%s3 + $0x70] sm:$0xff]
    %v1160 = vld [vmem:[%s3 + $0x78] sm:$0xff]
    %v1161 = vld [vmem:[%s3 + $0x80] sm:$0xff]
    %v1162 = vld [vmem:[%s3 + $0x88] sm:$0xff]
    %v1163 = vld [vmem:[%s3 + $0x90] sm:$0xff]
    %v1164 = vld [vmem:[%s3 + $0x98] sm:$0xff]
    %v1165 = vld [vmem:[%s3 + $0xa0] sm:$0xff]
    %v1166 = vld [vmem:[%s3 + $0xa8] sm:$0xff]
    %v1167 = vld [vmem:[%s3 + $0xb0] sm:$0xff]
    %v1168 = vld [vmem:[%s3 + $0xb8] sm:$0xff]
    %v1169 = vld [vmem:[%s3 + $0xc0] sm:$0xff]
    %v1170 = vld [vmem:[%s3 + $0xc8] sm:$0xff]
    %v1171 = vld [vmem:[%s3 + $0xd0] sm:$0xff]
    %v1172 = vld [vmem:[%s3 + $0xd8] sm:$0xff]
    %v1173 = vld [vmem:[%s3 + $0xe0] sm:$0xff]
    %v1174 = vld [vmem:[%s3 + $0xe8] sm:$0xff]
    %v1175 = vld [vmem:[%s3 + $0xf0] sm:$0xff]
    %v1176 = vld [vmem:[%s3 + $0xf8] sm:$0xff]
    %v1177 = vld [vmem:[%s4] sm:$0x3]
    %v1179 = vperm.slane %v1177, 0
    %v1180 = vperm.slane %v1177, 1
    %v1193 = vunpack.c.l.b16 %v1135
    %v1194 = vunpack.c.h.b16 %v1135
    %v1195 = vunpack.c.l.b16 %v1136
    %v1196 = vunpack.c.h.b16 %v1136
    %v1197 = vunpack.c.l.b16 %v1137
    %v1198 = vunpack.c.h.b16 %v1137
    %v1199 = vunpack.c.l.b16 %v1138
    %v1200 = vunpack.c.h.b16 %v1138
    %v1201 = vunpack.c.l.b16 %v1139
    %v1202 = vunpack.c.h.b16 %v1139
    %v1203 = vunpack.c.l.b16 %v1140
    %v1204 = vunpack.c.h.b16 %v1140
    %v1205 = vunpack.c.l.b16 %v1141
    %v1206 = vunpack.c.h.b16 %v1141
    %v1207 = vunpack.c.l.b16 %v1142
    %v1208 = vunpack.c.h.b16 %v1142
    %v1209 = vunpack.c.l.b16 %v1143
    %v1210 = vunpack.c.h.b16 %v1143
    %v1211 = vunpack.c.l.b16 %v1144
    %v1212 = vunpack.c.h.b16 %v1144
    %v1213 = vpack.c.b16 %v1195, %v1193
    %v1214 = vpack.c.b16 %v1196, %v1194
    %v1215 = vpack.c.b16 %v1199, %v1197
    %v1216 = vpack.c.b16 %v1200, %v1198
    %v1217 = vpack.c.b16 %v1203, %v1201
    %v1218 = vpack.c.b16 %v1204, %v1202
    %v1219 = vpack.c.b16 %v1207, %v1205
    %v1220 = vpack.c.b16 %v1208, %v1206
    %v1221 = vpack.c.b16 %v1211, %v1209
    %v1222 = vpack.c.b16 %v1212, %v1210
    %v1265 = vunpack.c.l.b16 %v1145
    %v1266 = vunpack.c.h.b16 %v1145
    %v1267 = vunpack.c.l.b16 %v1146
    %v1268 = vunpack.c.h.b16 %v1146
    %v1269 = vunpack.c.l.b16 %v1147
    %v1270 = vunpack.c.h.b16 %v1147
    %v1271 = vunpack.c.l.b16 %v1148
    %v1272 = vunpack.c.h.b16 %v1148
    %v1273 = vunpack.c.l.b16 %v1149
    %v1274 = vunpack.c.h.b16 %v1149
    %v1275 = vunpack.c.l.b16 %v1150
    %v1276 = vunpack.c.h.b16 %v1150
    %v1277 = vunpack.c.l.b16 %v1151
    %v1278 = vunpack.c.h.b16 %v1151
    %v1279 = vunpack.c.l.b16 %v1152
    %v1280 = vunpack.c.h.b16 %v1152
    %v1281 = vunpack.c.l.b16 %v1153
    %v1282 = vunpack.c.h.b16 %v1153
    %v1283 = vunpack.c.l.b16 %v1154
    %v1284 = vunpack.c.h.b16 %v1154
    %v1285 = vunpack.c.l.b16 %v1155
    %v1286 = vunpack.c.h.b16 %v1155
    %v1287 = vunpack.c.l.b16 %v1156
    %v1288 = vunpack.c.h.b16 %v1156
    %v1289 = vunpack.c.l.b16 %v1157
    %v1290 = vunpack.c.h.b16 %v1157
    %v1291 = vunpack.c.l.b16 %v1158
    %v1292 = vunpack.c.h.b16 %v1158
    %v1293 = vunpack.c.l.b16 %v1159
    %v1294 = vunpack.c.h.b16 %v1159
    %v1295 = vunpack.c.l.b16 %v1160
    %v1296 = vunpack.c.h.b16 %v1160
    %v1297 = vunpack.c.l.b16 %v1161
    %v1298 = vunpack.c.h.b16 %v1161
    %v1299 = vunpack.c.l.b16 %v1162
    %v1300 = vunpack.c.h.b16 %v1162
    %v1301 = vunpack.c.l.b16 %v1163
    %v1302 = vunpack.c.h.b16 %v1163
    %v1303 = vunpack.c.l.b16 %v1164
    %v1304 = vunpack.c.h.b16 %v1164
    %v1305 = vunpack.c.l.b16 %v1165
    %v1306 = vunpack.c.h.b16 %v1165
    %v1307 = vunpack.c.l.b16 %v1166
    %v1308 = vunpack.c.h.b16 %v1166
    %v1309 = vunpack.c.l.b16 %v1167
    %v1310 = vunpack.c.h.b16 %v1167
    %v1311 = vunpack.c.l.b16 %v1168
    %v1312 = vunpack.c.h.b16 %v1168
    %v1313 = vunpack.c.l.b16 %v1169
    %v1314 = vunpack.c.h.b16 %v1169
    %v1315 = vunpack.c.l.b16 %v1170
    %v1316 = vunpack.c.h.b16 %v1170
    %v1317 = vunpack.c.l.b16 %v1171
    %v1318 = vunpack.c.h.b16 %v1171
    %v1319 = vunpack.c.l.b16 %v1172
    %v1320 = vunpack.c.h.b16 %v1172
    %v1321 = vunpack.c.l.b16 %v1173
    %v1322 = vunpack.c.h.b16 %v1173
    %v1323 = vunpack.c.l.b16 %v1174
    %v1324 = vunpack.c.h.b16 %v1174
    %v1325 = vunpack.c.l.b16 %v1175
    %v1326 = vunpack.c.h.b16 %v1175
    %v1327 = vunpack.c.l.b16 %v1176
    %v1328 = vunpack.c.h.b16 %v1176
    %v1329 = vpack.c.b16 %v1267, %v1265
    %v1330 = vpack.c.b16 %v1268, %v1266
    %v1331 = vpack.c.b16 %v1271, %v1269
    %v1332 = vpack.c.b16 %v1272, %v1270
    %v1333 = vpack.c.b16 %v1275, %v1273
    %v1334 = vpack.c.b16 %v1276, %v1274
    %v1335 = vpack.c.b16 %v1279, %v1277
    %v1336 = vpack.c.b16 %v1280, %v1278
    %v1337 = vpack.c.b16 %v1283, %v1281
    %v1338 = vpack.c.b16 %v1284, %v1282
    %v1339 = vpack.c.b16 %v1287, %v1285
    %v1340 = vpack.c.b16 %v1288, %v1286
    %v1341 = vpack.c.b16 %v1291, %v1289
    %v1342 = vpack.c.b16 %v1292, %v1290
    %v1343 = vpack.c.b16 %v1295, %v1293
    %v1344 = vpack.c.b16 %v1296, %v1294
    %v1345 = vpack.c.b16 %v1299, %v1297
    %v1346 = vpack.c.b16 %v1300, %v1298
    %v1347 = vpack.c.b16 %v1303, %v1301
    %v1348 = vpack.c.b16 %v1304, %v1302
    %v1349 = vpack.c.b16 %v1307, %v1305
    %v1350 = vpack.c.b16 %v1308, %v1306
    %v1351 = vpack.c.b16 %v1311, %v1309
    %v1352 = vpack.c.b16 %v1312, %v1310
    %v1353 = vpack.c.b16 %v1315, %v1313
    %v1354 = vpack.c.b16 %v1316, %v1314
    %v1355 = vpack.c.b16 %v1319, %v1317
    %v1356 = vpack.c.b16 %v1320, %v1318
    %v1357 = vpack.c.b16 %v1323, %v1321
    %v1358 = vpack.c.b16 %v1324, %v1322
    %v1359 = vpack.c.b16 %v1327, %v1325
    %v1360 = vpack.c.b16 %v1328, %v1326
    %1393 = vmatpush.bf16.msra.mxu0 %v1343
    %1394 = vmatpush.bf16.msra.mxu0 %v1341
    %1395 = vmatpush.bf16.msra.mxu0 %v1339
    %1396 = vmatpush.bf16.msra.mxu0 %v1337
    %1397 = vmatpush.bf16.msra.mxu0 %v1335
    %1398 = vmatpush.bf16.msra.mxu0 %v1333
    %1399 = vmatpush.bf16.msra.mxu0 %v1331
    %1400 = vmatpush.bf16.msra.mxu0 %v1329
    %1401 = vmatmul.bf16.gmra.mxu0 %v1213
    %v1402 = vpop.f32.mrf.mxu0
    %v1403 = vadd.f32 %v1179, %v1402
    %v1404 = vpop.f32.mrf.mxu0
    %v1405 = vadd.f32 %v1179, %v1404
    %1406 = vmatmul.bf16.gmra.mxu0 %v1215
    %v1407 = vpop.f32.mrf.mxu0
    %v1408 = vadd.f32 %v1179, %v1407
    %v1409 = vpop.f32.mrf.mxu0
    %v1410 = vadd.f32 %v1179, %v1409
    %1411 = vmatmul.bf16.gmra.mxu0 %v1217
    %v1412 = vpop.f32.mrf.mxu0
    %v1413 = vadd.f32 %v1179, %v1412
    %v1414 = vpop.f32.mrf.mxu0
    %v1415 = vadd.f32 %v1179, %v1414
    %1416 = vmatmul.bf16.gmra.mxu0 %v1219
    %v1417 = vpop.f32.mrf.mxu0
    %v1418 = vadd.f32 %v1179, %v1417
    %v1419 = vpop.f32.mrf.mxu0
    %v1420 = vadd.f32 %v1179, %v1419
    %1421 = vmatmul.bf16.gmra.mxu0 %v1221
    %v1422 = vpop.f32.mrf.mxu0
    %v1423 = vadd.f32 %v1179, %v1422
    %v1424 = vpop.f32.mrf.mxu0
    %v1425 = vadd.f32 %v1179, %v1424
    %1426 = vdwg.mxu0
    %1427 = vmatpush.bf16.msra.mxu0 %v1359
    %1428 = vmatpush.bf16.msra.mxu0 %v1357
    %1429 = vmatpush.bf16.msra.mxu0 %v1355
    %1430 = vmatpush.bf16.msra.mxu0 %v1353
    %1431 = vmatpush.bf16.msra.mxu0 %v1351
    %1432 = vmatpush.bf16.msra.mxu0 %v1349
    %1433 = vmatpush.bf16.msra.mxu0 %v1347
    %1434 = vmatpush.bf16.msra.mxu0 %v1345
    %1435 = vmatmul.bf16.gmra.mxu0 %v1214
    %v1436 = vpop.f32.mrf.mxu0
    %v1437 = vadd.f32 %v1403, %v1436
    %v1438 = vpop.f32.mrf.mxu0
    %v1439 = vadd.f32 %v1405, %v1438
    %1440 = vmatmul.bf16.gmra.mxu0 %v1216
    %v1441 = vpop.f32.mrf.mxu0
    %v1442 = vadd.f32 %v1408, %v1441
    %v1443 = vpop.f32.mrf.mxu0
    %v1444 = vadd.f32 %v1410, %v1443
    %1445 = vmatmul.bf16.gmra.mxu0 %v1218
    %v1446 = vpop.f32.mrf.mxu0
    %v1447 = vadd.f32 %v1413, %v1446
    %v1448 = vpop.f32.mrf.mxu0
    %v1449 = vadd.f32 %v1415, %v1448
    %1450 = vmatmul.bf16.gmra.mxu0 %v1220
    %v1451 = vpop.f32.mrf.mxu0
    %v1452 = vadd.f32 %v1418, %v1451
    %v1453 = vpop.f32.mrf.mxu0
    %v1454 = vadd.f32 %v1420, %v1453
    %1455 = vmatmul.bf16.gmra.mxu0 %v1222
    %v1456 = vpop.f32.mrf.mxu0
    %v1457 = vadd.f32 %v1423, %v1456
    %v1458 = vpop.f32.mrf.mxu0
    %v1459 = vadd.f32 %v1425, %v1458
    %1460 = vdwg.mxu0
    %1461 = vmatpush.bf16.msra.mxu0 %v1344
    %1462 = vmatpush.bf16.msra.mxu0 %v1342
    %1463 = vmatpush.bf16.msra.mxu0 %v1340
    %1464 = vmatpush.bf16.msra.mxu0 %v1338
    %1465 = vmatpush.bf16.msra.mxu0 %v1336
    %1466 = vmatpush.bf16.msra.mxu0 %v1334
    %1467 = vmatpush.bf16.msra.mxu0 %v1332
    %1468 = vmatpush.bf16.msra.mxu0 %v1330
    %1469 = vmatmul.bf16.gmra.mxu0 %v1213
    %v1470 = vpop.f32.mrf.mxu0
    %v1471 = vadd.f32 %v1180, %v1470
    %v1472 = vpop.f32.mrf.mxu0
    %v1473 = vadd.f32 %v1180, %v1472
    %1474 = vmatmul.bf16.gmra.mxu0 %v1215
    %v1475 = vpop.f32.mrf.mxu0
    %v1476 = vadd.f32 %v1180, %v1475
    %v1477 = vpop.f32.mrf.mxu0
    %v1478 = vadd.f32 %v1180, %v1477
    %1479 = vmatmul.bf16.gmra.mxu0 %v1217
    %v1480 = vpop.f32.mrf.mxu0
    %v1481 = vadd.f32 %v1180, %v1480
    %v1482 = vpop.f32.mrf.mxu0
    %v1483 = vadd.f32 %v1180, %v1482
    %1484 = vmatmul.bf16.gmra.mxu0 %v1219
    %v1485 = vpop.f32.mrf.mxu0
    %v1486 = vadd.f32 %v1180, %v1485
    %v1487 = vpop.f32.mrf.mxu0
    %v1488 = vadd.f32 %v1180, %v1487
    %1489 = vmatmul.bf16.gmra.mxu0 %v1221
    %v1490 = vpop.f32.mrf.mxu0
    %v1491 = vadd.f32 %v1180, %v1490
    %v1492 = vpop.f32.mrf.mxu0
    %v1493 = vadd.f32 %v1180, %v1492
    %1494 = vdwg.mxu0
    %1495 = vmatpush.bf16.msra.mxu0 %v1360
    %1496 = vmatpush.bf16.msra.mxu0 %v1358
    %1497 = vmatpush.bf16.msra.mxu0 %v1356
    %1498 = vmatpush.bf16.msra.mxu0 %v1354
    %1499 = vmatpush.bf16.msra.mxu0 %v1352
    %1500 = vmatpush.bf16.msra.mxu0 %v1350
    %1501 = vmatpush.bf16.msra.mxu0 %v1348
    %1502 = vmatpush.bf16.msra.mxu0 %v1346
    %1503 = vmatmul.bf16.gmra.mxu0 %v1214
    %v1504 = vpop.f32.mrf.mxu0
    %v1505 = vadd.f32 %v1471, %v1504
    %v1506 = vpop.f32.mrf.mxu0
    %v1507 = vadd.f32 %v1473, %v1506
    %1508 = vmatmul.bf16.gmra.mxu0 %v1216
    %v1509 = vpop.f32.mrf.mxu0
    %v1510 = vadd.f32 %v1476, %v1509
    %v1511 = vpop.f32.mrf.mxu0
    %v1512 = vadd.f32 %v1478, %v1511
    %1513 = vmatmul.bf16.gmra.mxu0 %v1218
    %v1514 = vpop.f32.mrf.mxu0
    %v1515 = vadd.f32 %v1481, %v1514
    %v1516 = vpop.f32.mrf.mxu0
    %v1517 = vadd.f32 %v1483, %v1516
    %1518 = vmatmul.bf16.gmra.mxu0 %v1220
    %v1519 = vpop.f32.mrf.mxu0
    %v1520 = vadd.f32 %v1486, %v1519
    %v1521 = vpop.f32.mrf.mxu0
    %v1522 = vadd.f32 %v1488, %v1521
    %1523 = vmatmul.bf16.gmra.mxu0 %v1222
    %v1524 = vpop.f32.mrf.mxu0
    %v1525 = vadd.f32 %v1491, %v1524
    %v1526 = vpop.f32.mrf.mxu0
    %v1527 = vadd.f32 %v1493, %v1526
    %1528 = vdwg.mxu0
    %1529 = vst [vmem:[#allocation3] sm:$0xff] %v1437
    %1530 = vst [vmem:[#allocation3 + $0x8] sm:$0xff] %v1505
    %1531 = vst [vmem:[#allocation3 + $0x10] sm:$0xff] %v1439
    %1532 = vst [vmem:[#allocation3 + $0x18] sm:$0xff] %v1507
    %1533 = vst [vmem:[#allocation3 + $0x20] sm:$0xff] %v1442
    %1534 = vst [vmem:[#allocation3 + $0x28] sm:$0xff] %v1510
    %1535 = vst [vmem:[#allocation3 + $0x30] sm:$0xff] %v1444
    %1536 = vst [vmem:[#allocation3 + $0x38] sm:$0xff] %v1512
    %1537 = vst [vmem:[#allocation3 + $0x40] sm:$0xff] %v1447
    %1538 = vst [vmem:[#allocation3 + $0x48] sm:$0xff] %v1515
    %1539 = vst [vmem:[#allocation3 + $0x50] sm:$0xff] %v1449
    %1540 = vst [vmem:[#allocation3 + $0x58] sm:$0xff] %v1517
    %1541 = vst [vmem:[#allocation3 + $0x60] sm:$0xff] %v1452
    %1542 = vst [vmem:[#allocation3 + $0x68] sm:$0xff] %v1520
    %1543 = vst [vmem:[#allocation3 + $0x70] sm:$0xff] %v1454
    %1544 = vst [vmem:[#allocation3 + $0x78] sm:$0xff] %v1522
    %1545 = vst [vmem:[#allocation3 + $0x80] sm:$0xff] %v1457
    %1546 = vst [vmem:[#allocation3 + $0x88] sm:$0xff] %v1525
    %1547 = vst [vmem:[#allocation3 + $0x90] sm:$0xff] %v1459
    %1548 = vst [vmem:[#allocation3 + $0x98] sm:$0xff] %v1527
    // Predicated region
    $region26: #{vision_projector.1} parent=1 // pred_check
      _
    $region27: #{vision_projector.1} parent=1 // pred_check_branch
      %1550 = sbr.rel (0) target = $region29
    $region28: #{vision_projector.1} parent=1 // pred_region
      %1552 = vsyncadd [#allocation4], 0
      %s1553 = sshll.u32 [#allocation3], 4
      %s1554 = int_to_ptr.vmem [resolvable:$true] %s1553
      %s1555 = sshll.u32 %s5, 4
      %s1556 = int_to_ptr.hbm [resolvable:$true] %s1555
      %1561 = dma.vmem_to_hbm [thread:$0]  %s1554, 2560, %s1556, [#allocation4], 256, 256, 16
    $region29: #{vision_projector.1} parent=1 // pred_fallthru
      _
    // Predicated region
    $region30: #{vision_projector.1} parent=1 // pred_check
      _
    $region31: #{vision_projector.1} parent=1 // pred_check_branch
      %1563 = sbr.rel (0) target = $region33
    $region32: #{vision_projector.1} parent=1 // pred_region
      %1565 = dma.done [#allocation4], 2560
    $region33: #{vision_projector.1} parent=1 // pred_fallthru
      _
    %1566 = vsyncpa [#allocation4], 1

</llo_original>
